<compile_context>
chip_gen: v5e
topology: v5e:2x2
jax: 0.10.0
libtpu: 0.0.40
codegen_flags: <defaults>
</compile_context>

<pallas_src>
import jax
import jax.numpy as jnp
from jax.experimental import pallas as pl
from jax.experimental.pallas import tpu as pltpu

LANE = 128


def _round_up(x, m):
    return ((x + m - 1) // m) * m


def _choose_tile_m(M, requested):
    # Multiple of 256 (MXU-row friendly); when M allows, keep >=2 grid steps
    # so v7x's two TensorCores can split the "parallel" row axis.
    half = _round_up(max((M + 1) // 2, 1), 256)
    return max(256, min(requested, half))


def metal_embedding_kernel(idx_ref, tab_ref, b1_ref, w2_ref, b2_ref, out_ref):
    tm = out_ref.shape[0]
    vocab = tab_ref.shape[0]
    dt = tab_ref.dtype

    idx = idx_ref[...]                                          # (tm, 3) int32
    cols = jax.lax.broadcasted_iota(jnp.int32, (tm, vocab), 1)  # single iota
    # Combined one-hot over the stacked table (offsets are disjoint, so this is
    # exactly the concat of the three per-table gathers).  Exact in bf16.
    onehot = ((cols == idx[:, 0:1]).astype(dt)
              + (cols == idx[:, 1:2]).astype(dt)
              + (cols == idx[:, 2:3]).astype(dt))               # (tm, vocab)

    # Dense 1 (W1 already folded into the stacked table) + bias + ReLU.
    h = jnp.dot(onehot, tab_ref[...],
                preferred_element_type=jnp.float32) + b1_ref[...]
    h = jnp.maximum(h, 0.0)

    # Dense 2 (no activation); output stored at its true n_out width.
    o = jnp.dot(h.astype(w2_ref.dtype), w2_ref[...],
                preferred_element_type=jnp.float32) + b2_ref[...]
    out_ref[...] = o.astype(out_ref.dtype)


def metal_embedding_forward(metals, mgp, mpd, params, *,
                            tile_m=1024, operand_dtype=jnp.bfloat16):
    """metals/mgp/mpd: int32 [B, N].  Returns float32 [B, N, n_embed_out]."""
    B, N = metals.shape
    M = B * N

    src_tab = params["src_embedding"].astype(jnp.float32)  # [max_z, nb], row 0 zero
    gp_tab = params["gp_embedding"].astype(jnp.float32)    # [20, nb],    row 0 zero
    pd_tab = params["pd_embedding"].astype(jnp.float32)    # [8, nb],     row 0 zero
    w1, b1 = params["w1"], params["b1"]                    # [3*nb, 3*nb], [1, 3*nb]
    w2, b2 = params["w2"], params["b2"]                    # [3*nb, n_out], [1, n_out]

    max_z = src_tab.shape[0]
    nb = src_tab.shape[1]
    hidden = 3 * nb
    n_out = w2.shape[1]
    assert hidden <= LANE, "K-tiling for hidden > 128 not implemented"

    # Fold "gather row then multiply by W1 slab" into "gather from table@W1slab",
    # then stack the three folded tables into one with disjoint row offsets.
    a_src = src_tab @ w1[0 * nb:1 * nb]          # rows [0, max_z)
    a_gp = gp_tab @ w1[1 * nb:2 * nb]            # rows [max_z, max_z+20)
    a_pd = pd_tab @ w1[2 * nb:3 * nb]            # rows [max_z+20, max_z+28)
    a_all = jnp.concatenate([a_src, a_gp, a_pd], axis=0)      # [vocab_total, hidden]
    off_gp = max_z
    off_pd = max_z + gp_tab.shape[0]
    vocab_total = a_all.shape[0]
    vocab_pad = _round_up(max(vocab_total, LANE), LANE)

    tab_p = (jnp.zeros((vocab_pad, LANE), jnp.float32)
             .at[:vocab_total, :hidden].set(a_all).astype(operand_dtype))
    b1_p = jnp.zeros((1, LANE), jnp.float32).at[:, :hidden].set(b1)
    w2_p = (jnp.zeros((LANE, n_out), jnp.float32)
            .at[:hidden, :].set(w2).astype(operand_dtype))
    b2_p = b2.astype(jnp.float32).reshape(1, n_out)

    # Packed, pre-offset indices: one lane-dense-ish [M_pad, 3] int32 stream.
    tile_m = _choose_tile_m(M, tile_m)
    m_pad = _round_up(max(M, tile_m), tile_m)
    idx = jnp.stack([metals.reshape(M).astype(jnp.int32),
                     mgp.reshape(M).astype(jnp.int32) + off_gp,
                     mpd.reshape(M).astype(jnp.int32) + off_pd], axis=1)
    idx = jnp.pad(idx, ((0, m_pad - M), (0, 0)))               # padded rows -> 0

    grid = (m_pad // tile_m,)

    def full_spec(arr):  # whole array resident in VMEM, never re-fetched
        return pl.BlockSpec(arr.shape, lambda i: (0, 0))

    out = pl.pallas_call(
        metal_embedding_kernel,
        out_shape=jax.ShapeDtypeStruct((m_pad, n_out), jnp.float32),
        grid_spec=pl.GridSpec(
            grid=grid,
            in_specs=[
                pl.BlockSpec((tile_m, 3), lambda i: (i, 0)),   # packed indices
                full_spec(tab_p), full_spec(b1_p),
                full_spec(w2_p), full_spec(b2_p),
            ],
            out_specs=pl.BlockSpec((tile_m, n_out), lambda i: (i, 0)),
        ),
        compiler_params=pltpu.CompilerParams(
            dimension_semantics=("parallel",)),
    )(idx, tab_p, b1_p, w2_p, b2_p)

    return out[:M].reshape(B, N, n_out)


def init_params(key, max_z, n_metal_basis, n_embed_out):
    """Deterministic synthetic parameters matching MetalEmbedding.__init__."""
    k = jax.random.split(key, 7)
    nb = n_metal_basis
    hidden = 3 * nb

    def emb(kk, vocab):
        t = jax.random.normal(kk, (vocab, nb), jnp.float32) * 0.02
        return t.at[0].set(0.0)  # padding_idx=0

    def dense_w(kk, fan_in, fan_out):
        scale = 1.0 / jnp.sqrt(jnp.float32(fan_in))
        return jax.random.uniform(kk, (fan_in, fan_out), jnp.float32,
                                  -scale, scale)

    return {
        "src_embedding": emb(k[0], max_z),
        "gp_embedding": emb(k[1], 20),
        "pd_embedding": emb(k[2], 8),
        "w1": dense_w(k[3], hidden, hidden),
        "b1": jax.random.normal(k[4], (1, hidden), jnp.float32) * 0.01,
        "w2": dense_w(k[5], hidden, n_embed_out),
        "b2": jax.random.normal(k[6], (1, n_embed_out), jnp.float32) * 0.01,
    }


def _reference(metals, mgp, mpd, params):
    """Pure-JAX reference of the PyTorch forward, for sanity checking."""
    M = metals.size
    e = jnp.concatenate([
        jnp.take(params["src_embedding"], metals.reshape(M), axis=0),
        jnp.take(params["gp_embedding"], mgp.reshape(M), axis=0),
        jnp.take(params["pd_embedding"], mpd.reshape(M), axis=0),
    ], axis=-1)
    h = jnp.maximum(e @ params["w1"] + params["b1"], 0.0)
    o = h @ params["w2"] + params["b2"]
    return o.reshape(metals.shape + (params["w2"].shape[1],))


if __name__ == "__main__":
    key = jax.random.PRNGKey(0)
    max_z = 30
    n_metal_basis = 32
    n_embed_out = 32
    B, N = 2, 8  # 2 structures, 8 metal sites each -> M = 16 rows

    kp, ki1, ki2, ki3 = jax.random.split(key, 4)
    params = init_params(kp, max_z, n_metal_basis, n_embed_out)

    metals = jax.random.randint(ki1, (B, N), 0, max_z, dtype=jnp.int32)
    mgp = jax.random.randint(ki2, (B, N), 0, 20, dtype=jnp.int32)
    mpd = jax.random.randint(ki3, (B, N), 0, 8, dtype=jnp.int32)

    ref = _reference(metals, mgp, mpd, params)

    # f32-operand path: tight numerical check.
    out_f32 = metal_embedding_forward(metals, mgp, mpd, params,
                                      operand_dtype=jnp.float32)
    out_f32 = jax.block_until_ready(out_f32)
    assert out_f32.shape == (B, N, n_embed_out)
    err_f32 = float(jnp.max(jnp.abs(out_f32 - ref)))
    assert jnp.allclose(out_f32, ref, atol=1e-4, rtol=1e-4), err_f32

    # bf16-operand path (default; MXU-friendly on v5e/v6e/v7x): looser check.
    out_bf16 = metal_embedding_forward(metals, mgp, mpd, params,
                                       operand_dtype=jnp.bfloat16)
    out_bf16 = jax.block_until_ready(out_bf16)
    assert out_bf16.shape == (B, N, n_embed_out)
    err_bf16 = float(jnp.max(jnp.abs(out_bf16 - ref)))
    assert jnp.allclose(out_bf16, ref, atol=5e-3, rtol=5e-2), err_bf16

    print("KERNEL_OK")
</pallas_src>

<mosaic_0001>
module attributes {stable_mosaic.version = 11 : i64} {
  func.func @metal_embedding_kernel(%arg0: i32, %arg1: memref<256x3xi32, #tpu.memory_space<vmem>>, %arg2: memref<128x128xf32, #tpu.memory_space<vmem>>, %arg3: memref<1x128xf32, #tpu.memory_space<vmem>>, %arg4: memref<128x32xf32, #tpu.memory_space<vmem>>, %arg5: memref<1x32xf32, #tpu.memory_space<vmem>>, %arg6: memref<256x32xf32, #tpu.memory_space<vmem>>) attributes {dimension_semantics = [#tpu.dimension_semantics<parallel>], iteration_bounds = array<i64: 1>, scalar_prefetch = 0 : i64, scratch_operands = 0 : i64, tpu.core_type = #tpu.core_type<tc>, window_params = [{transform_indices = @transform_0, window_bounds = array<i64: 256, 3>}, {pipeline_mode = #tpu.pipeline_mode<synchronous>, transform_indices = @transform_1, window_bounds = array<i64: 128, 128>}, {pipeline_mode = #tpu.pipeline_mode<synchronous>, transform_indices = @transform_2, window_bounds = array<i64: 1, 128>}, {pipeline_mode = #tpu.pipeline_mode<synchronous>, transform_indices = @transform_3, window_bounds = array<i64: 128, 32>}, {pipeline_mode = #tpu.pipeline_mode<synchronous>, transform_indices = @transform_4, window_bounds = array<i64: 1, 32>}, {transform_indices = @transform_5, window_bounds = array<i64: 256, 32>}]} {
    %c0 = arith.constant 0 : index
    %c0_0 = arith.constant 0 : index
    %0 = vector.load %arg1[%c0, %c0_0] : memref<256x3xi32, #tpu.memory_space<vmem>>, vector<256x3xi32>
    %1 = tpu.iota {dimensions = array<i32: 1>} : vector<256x128xi32>
    %2 = vector.extract_strided_slice %0 {offsets = [0, 0], sizes = [256, 1], strides = [1, 1]} : vector<256x3xi32> to vector<256x1xi32>
    %3 = vector.broadcast %2 : vector<256x1xi32> to vector<256x128xi32>
    %4 = arith.cmpi eq, %1, %3 : vector<256x128xi32>
    %5 = arith.extui %4 : vector<256x128xi1> to vector<256x128xi32>
    %6 = arith.sitofp %5 : vector<256x128xi32> to vector<256x128xf32>
    %7 = vector.extract_strided_slice %0 {offsets = [0, 1], sizes = [256, 1], strides = [1, 1]} : vector<256x3xi32> to vector<256x1xi32>
    %8 = vector.broadcast %7 : vector<256x1xi32> to vector<256x128xi32>
    %9 = arith.cmpi eq, %1, %8 : vector<256x128xi32>
    %10 = arith.extui %9 : vector<256x128xi1> to vector<256x128xi32>
    %11 = arith.sitofp %10 : vector<256x128xi32> to vector<256x128xf32>
    %12 = arith.addf %6, %11 : vector<256x128xf32>
    %13 = vector.extract_strided_slice %0 {offsets = [0, 2], sizes = [256, 1], strides = [1, 1]} : vector<256x3xi32> to vector<256x1xi32>
    %14 = vector.broadcast %13 : vector<256x1xi32> to vector<256x128xi32>
    %15 = arith.cmpi eq, %1, %14 : vector<256x128xi32>
    %16 = arith.extui %15 : vector<256x128xi1> to vector<256x128xi32>
    %17 = arith.sitofp %16 : vector<256x128xi32> to vector<256x128xf32>
    %18 = arith.addf %12, %17 : vector<256x128xf32>
    %c0_1 = arith.constant 0 : index
    %c0_2 = arith.constant 0 : index
    %19 = vector.load %arg2[%c0_1, %c0_2] : memref<128x128xf32, #tpu.memory_space<vmem>>, vector<128x128xf32>
    %cst = arith.constant dense<0.000000e+00> : vector<256x128xf32>
    %20 = tpu.matmul %18, %19, %cst {dimension_numbers = #tpu.dot_dimension_numbers<[1], [0], [0], [1], [0, 0, 1, 1], [], []>} : vector<256x128xf32>, vector<128x128xf32>, vector<256x128xf32> -> vector<256x128xf32>
    %c0_3 = arith.constant 0 : index
    %c0_4 = arith.constant 0 : index
    %21 = vector.load %arg3[%c0_3, %c0_4] : memref<1x128xf32, #tpu.memory_space<vmem>>, vector<1x128xf32>
    %22 = vector.broadcast %21 : vector<1x128xf32> to vector<256x128xf32>
    %23 = arith.addf %20, %22 : vector<256x128xf32>
    %cst_5 = arith.constant 0.000000e+00 : f32
    %24 = vector.broadcast %cst_5 : f32 to vector<256x128xf32>
    %25 = arith.maximumf %23, %24 : vector<256x128xf32>
    %c0_6 = arith.constant 0 : index
    %c0_7 = arith.constant 0 : index
    %26 = vector.load %arg4[%c0_6, %c0_7] : memref<128x32xf32, #tpu.memory_space<vmem>>, vector<128x32xf32>
    %cst_8 = arith.constant dense<0.000000e+00> : vector<256x32xf32>
    %27 = tpu.matmul %25, %26, %cst_8 {dimension_numbers = #tpu.dot_dimension_numbers<[1], [0], [0], [1], [0, 0, 1, 1], [], []>} : vector<256x128xf32>, vector<128x32xf32>, vector<256x32xf32> -> vector<256x32xf32>
    %c0_9 = arith.constant 0 : index
    %c0_10 = arith.constant 0 : index
    %28 = vector.load %arg5[%c0_9, %c0_10] : memref<1x32xf32, #tpu.memory_space<vmem>>, vector<1x32xf32>
    %29 = vector.broadcast %28 : vector<1x32xf32> to vector<256x32xf32>
    %30 = arith.addf %27, %29 : vector<256x32xf32>
    %c0_11 = arith.constant 0 : index
    %c0_12 = arith.constant 0 : index
    %31 = vector.load %arg6[%c0_11, %c0_12] : memref<256x32xf32, #tpu.memory_space<vmem>>, vector<256x32xf32>
    tpu.vector_store %arg6[%c0_11, %c0_12], %30 {strides = array<i32>} : memref<256x32xf32, #tpu.memory_space<vmem>>, vector<256x32xf32>,
    return
  }
  func.func @transform_0(%arg0: i32) -> (i32, i32) {
    %c0_i32 = arith.constant 0 : i32
    %c0_i32_0 = arith.constant 0 : i32
    return %arg0, %c0_i32 : i32, i32
  }
  func.func @transform_1(%arg0: i32) -> (i32, i32) {
    %c0_i32 = arith.constant 0 : i32
    %c0_i32_0 = arith.constant 0 : i32
    %c0_i32_1 = arith.constant 0 : i32
    return %c0_i32, %c0_i32_0 : i32, i32
  }
  func.func @transform_2(%arg0: i32) -> (i32, i32) {
    %c0_i32 = arith.constant 0 : i32
    %c0_i32_0 = arith.constant 0 : i32
    %c0_i32_1 = arith.constant 0 : i32
    return %c0_i32, %c0_i32_0 : i32, i32
  }
  func.func @transform_3(%arg0: i32) -> (i32, i32) {
    %c0_i32 = arith.constant 0 : i32
    %c0_i32_0 = arith.constant 0 : i32
    %c0_i32_1 = arith.constant 0 : i32
    return %c0_i32, %c0_i32_0 : i32, i32
  }
  func.func @transform_4(%arg0: i32) -> (i32, i32) {
    %c0_i32 = arith.constant 0 : i32
    %c0_i32_0 = arith.constant 0 : i32
    %c0_i32_1 = arith.constant 0 : i32
    return %c0_i32, %c0_i32_0 : i32, i32
  }
  func.func @transform_5(%arg0: i32) -> (i32, i32) {
    %c0_i32 = arith.constant 0 : i32
    %c0_i32_0 = arith.constant 0 : i32
    return %arg0, %c0_i32 : i32, i32
  }
}

</mosaic_0001>

<llo_original>
// kernel: tpu_custom_call.1
$region0: #{tpu_custom_call.1}
  #allocation0 [shape = 'u32[]', space=smem, size = 0x4, offset = 0x4, fixed_abs, tag = 'smem constant byte address 0x4 - core index']
  #allocation1 [shape = 'u32[72,128]{1,0:T(1,128)}', space=vmem, size = 0x9000, scoped, tag = 'internal scratch']
  %s0 = inlined_call_operand.vmem [shape: s32[256,3], index: 0, kind: input, shape index: {}]
  %s1 = inlined_call_operand.vmem [shape: f32[128,128], index: 1, kind: input, shape index: {}]
  %s2 = inlined_call_operand.vmem [shape: f32[1,128], index: 2, kind: input, shape index: {}]
  %s3 = inlined_call_operand.vmem [shape: f32[128,32], index: 3, kind: input, shape index: {}]
  %s4 = inlined_call_operand.vmem [shape: f32[1,32], index: 4, kind: input, shape index: {}]
  %s5 = inlined_call_operand.vmem [shape: f32[256,32], index: 5, kind: output, shape index: {}]
  %s6 = sld [smem:[#allocation0]]
  $region30: #{tpu_custom_call.1} parent=0
    _
  %s8 = ssub.s32 1, %s6
  %s9 = scalar_select 0, %s8, %s6
  // Predicated region
  $region2: #{tpu_custom_call.1} parent=0 // pred_check
    _
  $region3: #{tpu_custom_call.1} parent=0 // pred_check_branch
    %11 = sbr.rel (0) target = $region5
  $region4: #{tpu_custom_call.1} parent=0 // pred_region
    _
  $region5: #{tpu_custom_call.1} parent=0 // pred_fallthru
    _
  // Predicated region
  $region6: #{tpu_custom_call.1} parent=0 // pred_check
    _
  $region7: #{tpu_custom_call.1} parent=0 // pred_check_branch
    %13 = sbr.rel (0) target = $region9
  $region8: #{tpu_custom_call.1} parent=0 // pred_region
    _
  $region9: #{tpu_custom_call.1} parent=0 // pred_fallthru
    _
  // Predicated region
  $region10: #{tpu_custom_call.1} parent=0 // pred_check
    _
  $region11: #{tpu_custom_call.1} parent=0 // pred_check_branch
    %15 = sbr.rel (0) target = $region13
  $region12: #{tpu_custom_call.1} parent=0 // pred_region
    _
  $region13: #{tpu_custom_call.1} parent=0 // pred_fallthru
    _
  // Predicated region
  $region14: #{tpu_custom_call.1} parent=0 // pred_check
    _
  $region15: #{tpu_custom_call.1} parent=0 // pred_check_branch
    %17 = sbr.rel (0) target = $region17
  $region16: #{tpu_custom_call.1} parent=0 // pred_region
    _
  $region17: #{tpu_custom_call.1} parent=0 // pred_fallthru
    _
  // Predicated region
  $region18: #{tpu_custom_call.1} parent=0 // pred_check
    _
  $region19: #{tpu_custom_call.1} parent=0 // pred_check_branch
    %19 = sbr.rel (0) target = $region21
  $region20: #{tpu_custom_call.1} parent=0 // pred_region
    _
  $region21: #{tpu_custom_call.1} parent=0 // pred_fallthru
    _
  %v20 = vld [vmem:[%s0] sm:$0xff]
  %v21 = vld [vmem:[%s0 + $0x8] sm:$0xff]
  %v22 = vld [vmem:[%s0 + $0x10] sm:$0xff]
  %v23 = vld [vmem:[%s0 + $0x18] sm:$0xff]
  %v24 = vld [vmem:[%s0 + $0x20] sm:$0xff]
  %v25 = vld [vmem:[%s0 + $0x28] sm:$0xff]
  %v26 = vld [vmem:[%s0 + $0x30] sm:$0xff]
  %v27 = vld [vmem:[%s0 + $0x38] sm:$0xff]
  %v28 = vld [vmem:[%s0 + $0x40] sm:$0xff]
  %v29 = vld [vmem:[%s0 + $0x48] sm:$0xff]
  %v30 = vld [vmem:[%s0 + $0x50] sm:$0xff]
  %v31 = vld [vmem:[%s0 + $0x58] sm:$0xff]
  %v32 = vld [vmem:[%s0 + $0x60] sm:$0xff]
  %v33 = vld [vmem:[%s0 + $0x68] sm:$0xff]
  %v34 = vld [vmem:[%s0 + $0x70] sm:$0xff]
  %v35 = vld [vmem:[%s0 + $0x78] sm:$0xff]
  %v36 = vld [vmem:[%s0 + $0x80] sm:$0xff]
  %v37 = vld [vmem:[%s0 + $0x88] sm:$0xff]
  %v38 = vld [vmem:[%s0 + $0x90] sm:$0xff]
  %v39 = vld [vmem:[%s0 + $0x98] sm:$0xff]
  %v40 = vld [vmem:[%s0 + $0xa0] sm:$0xff]
  %v41 = vld [vmem:[%s0 + $0xa8] sm:$0xff]
  %v42 = vld [vmem:[%s0 + $0xb0] sm:$0xff]
  %v43 = vld [vmem:[%s0 + $0xb8] sm:$0xff]
  %v44 = vld [vmem:[%s0 + $0xc0] sm:$0xff]
  %v45 = vld [vmem:[%s0 + $0xc8] sm:$0xff]
  %v46 = vld [vmem:[%s0 + $0xd0] sm:$0xff]
  %v47 = vld [vmem:[%s0 + $0xd8] sm:$0xff]
  %v48 = vld [vmem:[%s0 + $0xe0] sm:$0xff]
  %v49 = vld [vmem:[%s0 + $0xe8] sm:$0xff]
  %v50 = vld [vmem:[%s0 + $0xf0] sm:$0xff]
  %v51 = vld [vmem:[%s0 + $0xf8] sm:$0xff]
  %v52 = vlaneseq
  %v53 = vand.u32 %v52, 127
  %54 = vset.pattern.permute.xlu0 0
  %55 = vperm.xlu0 %54, %v20
  %v56 = vpop.permute.xlu0 %55
  %57 = vset.pattern.permute.xlu0 0
  %58 = vperm.xlu0 %57, %v21
  %v59 = vpop.permute.xlu0 %58
  %60 = vset.pattern.permute.xlu0 0
  %61 = vperm.xlu0 %60, %v22
  %v62 = vpop.permute.xlu0 %61
  %63 = vset.pattern.permute.xlu0 0
  %64 = vperm.xlu0 %63, %v23
  %v65 = vpop.permute.xlu0 %64
  %66 = vset.pattern.permute.xlu0 0
  %67 = vperm.xlu0 %66, %v24
  %v68 = vpop.permute.xlu0 %67
  %69 = vset.pattern.permute.xlu0 0
  %70 = vperm.xlu0 %69, %v25
  %v71 = vpop.permute.xlu0 %70
  %72 = vset.pattern.permute.xlu0 0
  %73 = vperm.xlu0 %72, %v26
  %v74 = vpop.permute.xlu0 %73
  %75 = vset.pattern.permute.xlu0 0
  %76 = vperm.xlu0 %75, %v27
  %v77 = vpop.permute.xlu0 %76
  %78 = vset.pattern.permute.xlu0 0
  %79 = vperm.xlu0 %78, %v28
  %v80 = vpop.permute.xlu0 %79
  %81 = vset.pattern.permute.xlu0 0
  %82 = vperm.xlu0 %81, %v29
  %v83 = vpop.permute.xlu0 %82
  %84 = vset.pattern.permute.xlu0 0
  %85 = vperm.xlu0 %84, %v30
  %v86 = vpop.permute.xlu0 %85
  %87 = vset.pattern.permute.xlu0 0
  %88 = vperm.xlu0 %87, %v31
  %v89 = vpop.permute.xlu0 %88
  %90 = vset.pattern.permute.xlu0 0
  %91 = vperm.xlu0 %90, %v32
  %v92 = vpop.permute.xlu0 %91
  %93 = vset.pattern.permute.xlu0 0
  %94 = vperm.xlu0 %93, %v33
  %v95 = vpop.permute.xlu0 %94
  %96 = vset.pattern.permute.xlu0 0
  %97 = vperm.xlu0 %96, %v34
  %v98 = vpop.permute.xlu0 %97
  %99 = vset.pattern.permute.xlu0 0
  %100 = vperm.xlu0 %99, %v35
  %v101 = vpop.permute.xlu0 %100
  %102 = vset.pattern.permute.xlu0 0
  %103 = vperm.xlu0 %102, %v36
  %v104 = vpop.permute.xlu0 %103
  %105 = vset.pattern.permute.xlu0 0
  %106 = vperm.xlu0 %105, %v37
  %v107 = vpop.permute.xlu0 %106
  %108 = vset.pattern.permute.xlu0 0
  %109 = vperm.xlu0 %108, %v38
  %v110 = vpop.permute.xlu0 %109
  %111 = vset.pattern.permute.xlu0 0
  %112 = vperm.xlu0 %111, %v39
  %v113 = vpop.permute.xlu0 %112
  %114 = vset.pattern.permute.xlu0 0
  %115 = vperm.xlu0 %114, %v40
  %v116 = vpop.permute.xlu0 %115
  %117 = vset.pattern.permute.xlu0 0
  %118 = vperm.xlu0 %117, %v41
  %v119 = vpop.permute.xlu0 %118
  %120 = vset.pattern.permute.xlu0 0
  %121 = vperm.xlu0 %120, %v42
  %v122 = vpop.permute.xlu0 %121
  %123 = vset.pattern.permute.xlu0 0
  %124 = vperm.xlu0 %123, %v43
  %v125 = vpop.permute.xlu0 %124
  %126 = vset.pattern.permute.xlu0 0
  %127 = vperm.xlu0 %126, %v44
  %v128 = vpop.permute.xlu0 %127
  %129 = vset.pattern.permute.xlu0 0
  %130 = vperm.xlu0 %129, %v45
  %v131 = vpop.permute.xlu0 %130
  %132 = vset.pattern.permute.xlu0 0
  %133 = vperm.xlu0 %132, %v46
  %v134 = vpop.permute.xlu0 %133
  %135 = vset.pattern.permute.xlu0 0
  %136 = vperm.xlu0 %135, %v47
  %v137 = vpop.permute.xlu0 %136
  %138 = vset.pattern.permute.xlu0 0
  %139 = vperm.xlu0 %138, %v48
  %v140 = vpop.permute.xlu0 %139
  %141 = vset.pattern.permute.xlu0 0
  %142 = vperm.xlu0 %141, %v49
  %v143 = vpop.permute.xlu0 %142
  %144 = vset.pattern.permute.xlu0 0
  %145 = vperm.xlu0 %144, %v50
  %v146 = vpop.permute.xlu0 %145
  %147 = vset.pattern.permute.xlu0 0
  %148 = vperm.xlu0 %147, %v51
  %v149 = vpop.permute.xlu0 %148
  %vm150 = vcmp.eq.s32.totalorder %v53, %v56
  %vm151 = vcmp.eq.s32.totalorder %v53, %v59
  %vm152 = vcmp.eq.s32.totalorder %v53, %v62
  %vm153 = vcmp.eq.s32.totalorder %v53, %v65
  %vm154 = vcmp.eq.s32.totalorder %v53, %v68
  %vm155 = vcmp.eq.s32.totalorder %v53, %v71
  %vm156 = vcmp.eq.s32.totalorder %v53, %v74
  %vm157 = vcmp.eq.s32.totalorder %v53, %v77
  %vm158 = vcmp.eq.s32.totalorder %v53, %v80
  %vm159 = vcmp.eq.s32.totalorder %v53, %v83
  %vm160 = vcmp.eq.s32.totalorder %v53, %v86
  %vm161 = vcmp.eq.s32.totalorder %v53, %v89
  %vm162 = vcmp.eq.s32.totalorder %v53, %v92
  %vm163 = vcmp.eq.s32.totalorder %v53, %v95
  %vm164 = vcmp.eq.s32.totalorder %v53, %v98
  %vm165 = vcmp.eq.s32.totalorder %v53, %v101
  %vm166 = vcmp.eq.s32.totalorder %v53, %v104
  %vm167 = vcmp.eq.s32.totalorder %v53, %v107
  %vm168 = vcmp.eq.s32.totalorder %v53, %v110
  %vm169 = vcmp.eq.s32.totalorder %v53, %v113
  %vm170 = vcmp.eq.s32.totalorder %v53, %v116
  %vm171 = vcmp.eq.s32.totalorder %v53, %v119
  %vm172 = vcmp.eq.s32.totalorder %v53, %v122
  %vm173 = vcmp.eq.s32.totalorder %v53, %v125
  %vm174 = vcmp.eq.s32.totalorder %v53, %v128
  %vm175 = vcmp.eq.s32.totalorder %v53, %v131
  %vm176 = vcmp.eq.s32.totalorder %v53, %v134
  %vm177 = vcmp.eq.s32.totalorder %v53, %v137
  %vm178 = vcmp.eq.s32.totalorder %v53, %v140
  %vm179 = vcmp.eq.s32.totalorder %v53, %v143
  %vm180 = vcmp.eq.s32.totalorder %v53, %v146
  %vm181 = vcmp.eq.s32.totalorder %v53, %v149
  %v182 = vsel %vm150, 1, 0
  %v183 = vsel %vm151, 1, 0
  %v184 = vsel %vm152, 1, 0
  %v185 = vsel %vm153, 1, 0
  %v186 = vsel %vm154, 1, 0
  %v187 = vsel %vm155, 1, 0
  %v188 = vsel %vm156, 1, 0
  %v189 = vsel %vm157, 1, 0
  %v190 = vsel %vm158, 1, 0
  %v191 = vsel %vm159, 1, 0
  %v192 = vsel %vm160, 1, 0
  %v193 = vsel %vm161, 1, 0
  %v194 = vsel %vm162, 1, 0
  %v195 = vsel %vm163, 1, 0
  %v196 = vsel %vm164, 1, 0
  %v197 = vsel %vm165, 1, 0
  %v198 = vsel %vm166, 1, 0
  %v199 = vsel %vm167, 1, 0
  %v200 = vsel %vm168, 1, 0
  %v201 = vsel %vm169, 1, 0
  %v202 = vsel %vm170, 1, 0
  %v203 = vsel %vm171, 1, 0
  %v204 = vsel %vm172, 1, 0
  %v205 = vsel %vm173, 1, 0
  %v206 = vsel %vm174, 1, 0
  %v207 = vsel %vm175, 1, 0
  %v208 = vsel %vm176, 1, 0
  %v209 = vsel %vm177, 1, 0
  %v210 = vsel %vm178, 1, 0
  %v211 = vsel %vm179, 1, 0
  %v212 = vsel %vm180, 1, 0
  %v213 = vsel %vm181, 1, 0
  %v214 = vcvt.s32.f32 %v182
  %v215 = vcvt.s32.f32 %v183
  %v216 = vcvt.s32.f32 %v184
  %v217 = vcvt.s32.f32 %v185
  %v218 = vcvt.s32.f32 %v186
  %v219 = vcvt.s32.f32 %v187
  %v220 = vcvt.s32.f32 %v188
  %v221 = vcvt.s32.f32 %v189
  %v222 = vcvt.s32.f32 %v190
  %v223 = vcvt.s32.f32 %v191
  %v224 = vcvt.s32.f32 %v192
  %v225 = vcvt.s32.f32 %v193
  %v226 = vcvt.s32.f32 %v194
  %v227 = vcvt.s32.f32 %v195
  %v228 = vcvt.s32.f32 %v196
  %v229 = vcvt.s32.f32 %v197
  %v230 = vcvt.s32.f32 %v198
  %v231 = vcvt.s32.f32 %v199
  %v232 = vcvt.s32.f32 %v200
  %v233 = vcvt.s32.f32 %v201
  %v234 = vcvt.s32.f32 %v202
  %v235 = vcvt.s32.f32 %v203
  %v236 = vcvt.s32.f32 %v204
  %v237 = vcvt.s32.f32 %v205
  %v238 = vcvt.s32.f32 %v206
  %v239 = vcvt.s32.f32 %v207
  %v240 = vcvt.s32.f32 %v208
  %v241 = vcvt.s32.f32 %v209
  %v242 = vcvt.s32.f32 %v210
  %v243 = vcvt.s32.f32 %v211
  %v244 = vcvt.s32.f32 %v212
  %v245 = vcvt.s32.f32 %v213
  %246 = vset.pattern.permute.xlu0 1
  %247 = vperm.xlu0 %246, %v20
  %v248 = vpop.permute.xlu0 %247
  %249 = vset.pattern.permute.xlu0 1
  %250 = vperm.xlu0 %249, %v21
  %v251 = vpop.permute.xlu0 %250
  %252 = vset.pattern.permute.xlu0 1
  %253 = vperm.xlu0 %252, %v22
  %v254 = vpop.permute.xlu0 %253
  %255 = vset.pattern.permute.xlu0 1
  %256 = vperm.xlu0 %255, %v23
  %v257 = vpop.permute.xlu0 %256
  %258 = vset.pattern.permute.xlu0 1
  %259 = vperm.xlu0 %258, %v24
  %v260 = vpop.permute.xlu0 %259
  %261 = vset.pattern.permute.xlu0 1
  %262 = vperm.xlu0 %261, %v25
  %v263 = vpop.permute.xlu0 %262
  %264 = vset.pattern.permute.xlu0 1
  %265 = vperm.xlu0 %264, %v26
  %v266 = vpop.permute.xlu0 %265
  %267 = vset.pattern.permute.xlu0 1
  %268 = vperm.xlu0 %267, %v27
  %v269 = vpop.permute.xlu0 %268
  %270 = vset.pattern.permute.xlu0 1
  %271 = vperm.xlu0 %270, %v28
  %v272 = vpop.permute.xlu0 %271
  %273 = vset.pattern.permute.xlu0 1
  %274 = vperm.xlu0 %273, %v29
  %v275 = vpop.permute.xlu0 %274
  %276 = vset.pattern.permute.xlu0 1
  %277 = vperm.xlu0 %276, %v30
  %v278 = vpop.permute.xlu0 %277
  %279 = vset.pattern.permute.xlu0 1
  %280 = vperm.xlu0 %279, %v31
  %v281 = vpop.permute.xlu0 %280
  %282 = vset.pattern.permute.xlu0 1
  %283 = vperm.xlu0 %282, %v32
  %v284 = vpop.permute.xlu0 %283
  %285 = vset.pattern.permute.xlu0 1
  %286 = vperm.xlu0 %285, %v33
  %v287 = vpop.permute.xlu0 %286
  %288 = vset.pattern.permute.xlu0 1
  %289 = vperm.xlu0 %288, %v34
  %v290 = vpop.permute.xlu0 %289
  %291 = vset.pattern.permute.xlu0 1
  %292 = vperm.xlu0 %291, %v35
  %v293 = vpop.permute.xlu0 %292
  %294 = vset.pattern.permute.xlu0 1
  %295 = vperm.xlu0 %294, %v36
  %v296 = vpop.permute.xlu0 %295
  %297 = vset.pattern.permute.xlu0 1
  %298 = vperm.xlu0 %297, %v37
  %v299 = vpop.permute.xlu0 %298
  %300 = vset.pattern.permute.xlu0 1
  %301 = vperm.xlu0 %300, %v38
  %v302 = vpop.permute.xlu0 %301
  %303 = vset.pattern.permute.xlu0 1
  %304 = vperm.xlu0 %303, %v39
  %v305 = vpop.permute.xlu0 %304
  %306 = vset.pattern.permute.xlu0 1
  %307 = vperm.xlu0 %306, %v40
  %v308 = vpop.permute.xlu0 %307
  %309 = vset.pattern.permute.xlu0 1
  %310 = vperm.xlu0 %309, %v41
  %v311 = vpop.permute.xlu0 %310
  %312 = vset.pattern.permute.xlu0 1
  %313 = vperm.xlu0 %312, %v42
  %v314 = vpop.permute.xlu0 %313
  %315 = vset.pattern.permute.xlu0 1
  %316 = vperm.xlu0 %315, %v43
  %v317 = vpop.permute.xlu0 %316
  %318 = vset.pattern.permute.xlu0 1
  %319 = vperm.xlu0 %318, %v44
  %v320 = vpop.permute.xlu0 %319
  %321 = vset.pattern.permute.xlu0 1
  %322 = vperm.xlu0 %321, %v45
  %v323 = vpop.permute.xlu0 %322
  %324 = vset.pattern.permute.xlu0 1
  %325 = vperm.xlu0 %324, %v46
  %v326 = vpop.permute.xlu0 %325
  %327 = vset.pattern.permute.xlu0 1
  %328 = vperm.xlu0 %327, %v47
  %v329 = vpop.permute.xlu0 %328
  %330 = vset.pattern.permute.xlu0 1
  %331 = vperm.xlu0 %330, %v48
  %v332 = vpop.permute.xlu0 %331
  %333 = vset.pattern.permute.xlu0 1
  %334 = vperm.xlu0 %333, %v49
  %v335 = vpop.permute.xlu0 %334
  %336 = vset.pattern.permute.xlu0 1
  %337 = vperm.xlu0 %336, %v50
  %v338 = vpop.permute.xlu0 %337
  %339 = vset.pattern.permute.xlu0 1
  %340 = vperm.xlu0 %339, %v51
  %v341 = vpop.permute.xlu0 %340
  %vm342 = vcmp.eq.s32.totalorder %v53, %v248
  %vm343 = vcmp.eq.s32.totalorder %v53, %v251
  %vm344 = vcmp.eq.s32.totalorder %v53, %v254
  %vm345 = vcmp.eq.s32.totalorder %v53, %v257
  %vm346 = vcmp.eq.s32.totalorder %v53, %v260
  %vm347 = vcmp.eq.s32.totalorder %v53, %v263
  %vm348 = vcmp.eq.s32.totalorder %v53, %v266
  %vm349 = vcmp.eq.s32.totalorder %v53, %v269
  %vm350 = vcmp.eq.s32.totalorder %v53, %v272
  %vm351 = vcmp.eq.s32.totalorder %v53, %v275
  %vm352 = vcmp.eq.s32.totalorder %v53, %v278
  %vm353 = vcmp.eq.s32.totalorder %v53, %v281
  %vm354 = vcmp.eq.s32.totalorder %v53, %v284
  %vm355 = vcmp.eq.s32.totalorder %v53, %v287
  %vm356 = vcmp.eq.s32.totalorder %v53, %v290
  %vm357 = vcmp.eq.s32.totalorder %v53, %v293
  %vm358 = vcmp.eq.s32.totalorder %v53, %v296
  %vm359 = vcmp.eq.s32.totalorder %v53, %v299
  %vm360 = vcmp.eq.s32.totalorder %v53, %v302
  %vm361 = vcmp.eq.s32.totalorder %v53, %v305
  %vm362 = vcmp.eq.s32.totalorder %v53, %v308
  %vm363 = vcmp.eq.s32.totalorder %v53, %v311
  %vm364 = vcmp.eq.s32.totalorder %v53, %v314
  %vm365 = vcmp.eq.s32.totalorder %v53, %v317
  %vm366 = vcmp.eq.s32.totalorder %v53, %v320
  %vm367 = vcmp.eq.s32.totalorder %v53, %v323
  %vm368 = vcmp.eq.s32.totalorder %v53, %v326
  %vm369 = vcmp.eq.s32.totalorder %v53, %v329
  %vm370 = vcmp.eq.s32.totalorder %v53, %v332
  %vm371 = vcmp.eq.s32.totalorder %v53, %v335
  %vm372 = vcmp.eq.s32.totalorder %v53, %v338
  %vm373 = vcmp.eq.s32.totalorder %v53, %v341
  %v374 = vsel %vm342, 1, 0
  %v375 = vsel %vm343, 1, 0
  %v376 = vsel %vm344, 1, 0
  %v377 = vsel %vm345, 1, 0
  %v378 = vsel %vm346, 1, 0
  %v379 = vsel %vm347, 1, 0
  %v380 = vsel %vm348, 1, 0
  %v381 = vsel %vm349, 1, 0
  %v382 = vsel %vm350, 1, 0
  %v383 = vsel %vm351, 1, 0
  %v384 = vsel %vm352, 1, 0
  %v385 = vsel %vm353, 1, 0
  %v386 = vsel %vm354, 1, 0
  %v387 = vsel %vm355, 1, 0
  %v388 = vsel %vm356, 1, 0
  %v389 = vsel %vm357, 1, 0
  %v390 = vsel %vm358, 1, 0
  %v391 = vsel %vm359, 1, 0
  %v392 = vsel %vm360, 1, 0
  %v393 = vsel %vm361, 1, 0
  %v394 = vsel %vm362, 1, 0
  %v395 = vsel %vm363, 1, 0
  %v396 = vsel %vm364, 1, 0
  %v397 = vsel %vm365, 1, 0
  %v398 = vsel %vm366, 1, 0
  %v399 = vsel %vm367, 1, 0
  %v400 = vsel %vm368, 1, 0
  %v401 = vsel %vm369, 1, 0
  %v402 = vsel %vm370, 1, 0
  %v403 = vsel %vm371, 1, 0
  %v404 = vsel %vm372, 1, 0
  %v405 = vsel %vm373, 1, 0
  %v406 = vcvt.s32.f32 %v374
  %v407 = vcvt.s32.f32 %v375
  %v408 = vcvt.s32.f32 %v376
  %v409 = vcvt.s32.f32 %v377
  %v410 = vcvt.s32.f32 %v378
  %v411 = vcvt.s32.f32 %v379
  %v412 = vcvt.s32.f32 %v380
  %v413 = vcvt.s32.f32 %v381
  %v414 = vcvt.s32.f32 %v382
  %v415 = vcvt.s32.f32 %v383
  %v416 = vcvt.s32.f32 %v384
  %v417 = vcvt.s32.f32 %v385
  %v418 = vcvt.s32.f32 %v386
  %v419 = vcvt.s32.f32 %v387
  %v420 = vcvt.s32.f32 %v388
  %v421 = vcvt.s32.f32 %v389
  %v422 = vcvt.s32.f32 %v390
  %v423 = vcvt.s32.f32 %v391
  %v424 = vcvt.s32.f32 %v392
  %v425 = vcvt.s32.f32 %v393
  %v426 = vcvt.s32.f32 %v394
  %v427 = vcvt.s32.f32 %v395
  %v428 = vcvt.s32.f32 %v396
  %v429 = vcvt.s32.f32 %v397
  %v430 = vcvt.s32.f32 %v398
  %v431 = vcvt.s32.f32 %v399
  %v432 = vcvt.s32.f32 %v400
  %v433 = vcvt.s32.f32 %v401
  %v434 = vcvt.s32.f32 %v402
  %v435 = vcvt.s32.f32 %v403
  %v436 = vcvt.s32.f32 %v404
  %v437 = vcvt.s32.f32 %v405
  %v438 = vadd.f32 %v214, %v406
  %v439 = vadd.f32 %v215, %v407
  %v440 = vadd.f32 %v216, %v408
  %v441 = vadd.f32 %v217, %v409
  %v442 = vadd.f32 %v218, %v410
  %v443 = vadd.f32 %v219, %v411
  %v444 = vadd.f32 %v220, %v412
  %v445 = vadd.f32 %v221, %v413
  %v446 = vadd.f32 %v222, %v414
  %v447 = vadd.f32 %v223, %v415
  %v448 = vadd.f32 %v224, %v416
  %v449 = vadd.f32 %v225, %v417
  %v450 = vadd.f32 %v226, %v418
  %v451 = vadd.f32 %v227, %v419
  %v452 = vadd.f32 %v228, %v420
  %v453 = vadd.f32 %v229, %v421
  %v454 = vadd.f32 %v230, %v422
  %v455 = vadd.f32 %v231, %v423
  %v456 = vadd.f32 %v232, %v424
  %v457 = vadd.f32 %v233, %v425
  %v458 = vadd.f32 %v234, %v426
  %v459 = vadd.f32 %v235, %v427
  %v460 = vadd.f32 %v236, %v428
  %v461 = vadd.f32 %v237, %v429
  %v462 = vadd.f32 %v238, %v430
  %v463 = vadd.f32 %v239, %v431
  %v464 = vadd.f32 %v240, %v432
  %v465 = vadd.f32 %v241, %v433
  %v466 = vadd.f32 %v242, %v434
  %v467 = vadd.f32 %v243, %v435
  %v468 = vadd.f32 %v244, %v436
  %v469 = vadd.f32 %v245, %v437
  %470 = vset.pattern.permute.xlu0 2
  %471 = vperm.xlu0 %470, %v20
  %v472 = vpop.permute.xlu0 %471
  %473 = vset.pattern.permute.xlu0 2
  %474 = vperm.xlu0 %473, %v21
  %v475 = vpop.permute.xlu0 %474
  %476 = vset.pattern.permute.xlu0 2
  %477 = vperm.xlu0 %476, %v22
  %v478 = vpop.permute.xlu0 %477
  %479 = vset.pattern.permute.xlu0 2
  %480 = vperm.xlu0 %479, %v23
  %v481 = vpop.permute.xlu0 %480
  %482 = vset.pattern.permute.xlu0 2
  %483 = vperm.xlu0 %482, %v24
  %v484 = vpop.permute.xlu0 %483
  %485 = vset.pattern.permute.xlu0 2
  %486 = vperm.xlu0 %485, %v25
  %v487 = vpop.permute.xlu0 %486
  %488 = vset.pattern.permute.xlu0 2
  %489 = vperm.xlu0 %488, %v26
  %v490 = vpop.permute.xlu0 %489
  %491 = vset.pattern.permute.xlu0 2
  %492 = vperm.xlu0 %491, %v27
  %v493 = vpop.permute.xlu0 %492
  %494 = vset.pattern.permute.xlu0 2
  %495 = vperm.xlu0 %494, %v28
  %v496 = vpop.permute.xlu0 %495
  %497 = vset.pattern.permute.xlu0 2
  %498 = vperm.xlu0 %497, %v29
  %v499 = vpop.permute.xlu0 %498
  %500 = vset.pattern.permute.xlu0 2
  %501 = vperm.xlu0 %500, %v30
  %v502 = vpop.permute.xlu0 %501
  %503 = vset.pattern.permute.xlu0 2
  %504 = vperm.xlu0 %503, %v31
  %v505 = vpop.permute.xlu0 %504
  %506 = vset.pattern.permute.xlu0 2
  %507 = vperm.xlu0 %506, %v32
  %v508 = vpop.permute.xlu0 %507
  %509 = vset.pattern.permute.xlu0 2
  %510 = vperm.xlu0 %509, %v33
  %v511 = vpop.permute.xlu0 %510
  %512 = vset.pattern.permute.xlu0 2
  %513 = vperm.xlu0 %512, %v34
  %v514 = vpop.permute.xlu0 %513
  %515 = vset.pattern.permute.xlu0 2
  %516 = vperm.xlu0 %515, %v35
  %v517 = vpop.permute.xlu0 %516
  %518 = vset.pattern.permute.xlu0 2
  %519 = vperm.xlu0 %518, %v36
  %v520 = vpop.permute.xlu0 %519
  %521 = vset.pattern.permute.xlu0 2
  %522 = vperm.xlu0 %521, %v37
  %v523 = vpop.permute.xlu0 %522
  %524 = vset.pattern.permute.xlu0 2
  %525 = vperm.xlu0 %524, %v38
  %v526 = vpop.permute.xlu0 %525
  %527 = vset.pattern.permute.xlu0 2
  %528 = vperm.xlu0 %527, %v39
  %v529 = vpop.permute.xlu0 %528
  %530 = vset.pattern.permute.xlu0 2
  %531 = vperm.xlu0 %530, %v40
  %v532 = vpop.permute.xlu0 %531
  %533 = vset.pattern.permute.xlu0 2
  %534 = vperm.xlu0 %533, %v41
  %v535 = vpop.permute.xlu0 %534
  %536 = vset.pattern.permute.xlu0 2
  %537 = vperm.xlu0 %536, %v42
  %v538 = vpop.permute.xlu0 %537
  %539 = vset.pattern.permute.xlu0 2
  %540 = vperm.xlu0 %539, %v43
  %v541 = vpop.permute.xlu0 %540
  %542 = vset.pattern.permute.xlu0 2
  %543 = vperm.xlu0 %542, %v44
  %v544 = vpop.permute.xlu0 %543
  %545 = vset.pattern.permute.xlu0 2
  %546 = vperm.xlu0 %545, %v45
  %v547 = vpop.permute.xlu0 %546
  %548 = vset.pattern.permute.xlu0 2
  %549 = vperm.xlu0 %548, %v46
  %v550 = vpop.permute.xlu0 %549
  %551 = vset.pattern.permute.xlu0 2
  %552 = vperm.xlu0 %551, %v47
  %v553 = vpop.permute.xlu0 %552
  %554 = vset.pattern.permute.xlu0 2
  %555 = vperm.xlu0 %554, %v48
  %v556 = vpop.permute.xlu0 %555
  %557 = vset.pattern.permute.xlu0 2
  %558 = vperm.xlu0 %557, %v49
  %v559 = vpop.permute.xlu0 %558
  %560 = vset.pattern.permute.xlu0 2
  %561 = vperm.xlu0 %560, %v50
  %v562 = vpop.permute.xlu0 %561
  %563 = vset.pattern.permute.xlu0 2
  %564 = vperm.xlu0 %563, %v51
  %v565 = vpop.permute.xlu0 %564
  %vm566 = vcmp.eq.s32.totalorder %v53, %v472
  %vm567 = vcmp.eq.s32.totalorder %v53, %v475
  %vm568 = vcmp.eq.s32.totalorder %v53, %v478
  %vm569 = vcmp.eq.s32.totalorder %v53, %v481
  %vm570 = vcmp.eq.s32.totalorder %v53, %v484
  %vm571 = vcmp.eq.s32.totalorder %v53, %v487
  %vm572 = vcmp.eq.s32.totalorder %v53, %v490
  %vm573 = vcmp.eq.s32.totalorder %v53, %v493
  %vm574 = vcmp.eq.s32.totalorder %v53, %v496
  %vm575 = vcmp.eq.s32.totalorder %v53, %v499
  %vm576 = vcmp.eq.s32.totalorder %v53, %v502
  %vm577 = vcmp.eq.s32.totalorder %v53, %v505
  %vm578 = vcmp.eq.s32.totalorder %v53, %v508
  %vm579 = vcmp.eq.s32.totalorder %v53, %v511
  %vm580 = vcmp.eq.s32.totalorder %v53, %v514
  %vm581 = vcmp.eq.s32.totalorder %v53, %v517
  %vm582 = vcmp.eq.s32.totalorder %v53, %v520
  %vm583 = vcmp.eq.s32.totalorder %v53, %v523
  %vm584 = vcmp.eq.s32.totalorder %v53, %v526
  %vm585 = vcmp.eq.s32.totalorder %v53, %v529
  %vm586 = vcmp.eq.s32.totalorder %v53, %v532
  %vm587 = vcmp.eq.s32.totalorder %v53, %v535
  %vm588 = vcmp.eq.s32.totalorder %v53, %v538
  %vm589 = vcmp.eq.s32.totalorder %v53, %v541
  %vm590 = vcmp.eq.s32.totalorder %v53, %v544
  %vm591 = vcmp.eq.s32.totalorder %v53, %v547
  %vm592 = vcmp.eq.s32.totalorder %v53, %v550
  %vm593 = vcmp.eq.s32.totalorder %v53, %v553
  %vm594 = vcmp.eq.s32.totalorder %v53, %v556
  %vm595 = vcmp.eq.s32.totalorder %v53, %v559
  %vm596 = vcmp.eq.s32.totalorder %v53, %v562
  %vm597 = vcmp.eq.s32.totalorder %v53, %v565
  %v598 = vsel %vm566, 1, 0
  %v599 = vsel %vm567, 1, 0
  %v600 = vsel %vm568, 1, 0
  %v601 = vsel %vm569, 1, 0
  %v602 = vsel %vm570, 1, 0
  %v603 = vsel %vm571, 1, 0
  %v604 = vsel %vm572, 1, 0
  %v605 = vsel %vm573, 1, 0
  %v606 = vsel %vm574, 1, 0
  %v607 = vsel %vm575, 1, 0
  %v608 = vsel %vm576, 1, 0
  %v609 = vsel %vm577, 1, 0
  %v610 = vsel %vm578, 1, 0
  %v611 = vsel %vm579, 1, 0
  %v612 = vsel %vm580, 1, 0
  %v613 = vsel %vm581, 1, 0
  %v614 = vsel %vm582, 1, 0
  %v615 = vsel %vm583, 1, 0
  %v616 = vsel %vm584, 1, 0
  %v617 = vsel %vm585, 1, 0
  %v618 = vsel %vm586, 1, 0
  %v619 = vsel %vm587, 1, 0
  %v620 = vsel %vm588, 1, 0
  %v621 = vsel %vm589, 1, 0
  %v622 = vsel %vm590, 1, 0
  %v623 = vsel %vm591, 1, 0
  %v624 = vsel %vm592, 1, 0
  %v625 = vsel %vm593, 1, 0
  %v626 = vsel %vm594, 1, 0
  %v627 = vsel %vm595, 1, 0
  %v628 = vsel %vm596, 1, 0
  %v629 = vsel %vm597, 1, 0
  %v630 = vcvt.s32.f32 %v598
  %v631 = vcvt.s32.f32 %v599
  %v632 = vcvt.s32.f32 %v600
  %v633 = vcvt.s32.f32 %v601
  %v634 = vcvt.s32.f32 %v602
  %v635 = vcvt.s32.f32 %v603
  %v636 = vcvt.s32.f32 %v604
  %v637 = vcvt.s32.f32 %v605
  %v638 = vcvt.s32.f32 %v606
  %v639 = vcvt.s32.f32 %v607
  %v640 = vcvt.s32.f32 %v608
  %v641 = vcvt.s32.f32 %v609
  %v642 = vcvt.s32.f32 %v610
  %v643 = vcvt.s32.f32 %v611
  %v644 = vcvt.s32.f32 %v612
  %v645 = vcvt.s32.f32 %v613
  %v646 = vcvt.s32.f32 %v614
  %v647 = vcvt.s32.f32 %v615
  %v648 = vcvt.s32.f32 %v616
  %v649 = vcvt.s32.f32 %v617
  %v650 = vcvt.s32.f32 %v618
  %v651 = vcvt.s32.f32 %v619
  %v652 = vcvt.s32.f32 %v620
  %v653 = vcvt.s32.f32 %v621
  %v654 = vcvt.s32.f32 %v622
  %v655 = vcvt.s32.f32 %v623
  %v656 = vcvt.s32.f32 %v624
  %v657 = vcvt.s32.f32 %v625
  %v658 = vcvt.s32.f32 %v626
  %v659 = vcvt.s32.f32 %v627
  %v660 = vcvt.s32.f32 %v628
  %v661 = vcvt.s32.f32 %v629
  %v662 = vadd.f32 %v438, %v630
  %v663 = vadd.f32 %v439, %v631
  %v664 = vadd.f32 %v440, %v632
  %v665 = vadd.f32 %v441, %v633
  %v666 = vadd.f32 %v442, %v634
  %v667 = vadd.f32 %v443, %v635
  %v668 = vadd.f32 %v444, %v636
  %v669 = vadd.f32 %v445, %v637
  %v670 = vadd.f32 %v446, %v638
  %v671 = vadd.f32 %v447, %v639
  %v672 = vadd.f32 %v448, %v640
  %v673 = vadd.f32 %v449, %v641
  %v674 = vadd.f32 %v450, %v642
  %v675 = vadd.f32 %v451, %v643
  %v676 = vadd.f32 %v452, %v644
  %v677 = vadd.f32 %v453, %v645
  %v678 = vadd.f32 %v454, %v646
  %v679 = vadd.f32 %v455, %v647
  %v680 = vadd.f32 %v456, %v648
  %v681 = vadd.f32 %v457, %v649
  %v682 = vadd.f32 %v458, %v650
  %v683 = vadd.f32 %v459, %v651
  %v684 = vadd.f32 %v460, %v652
  %v685 = vadd.f32 %v461, %v653
  %v686 = vadd.f32 %v462, %v654
  %v687 = vadd.f32 %v463, %v655
  %v688 = vadd.f32 %v464, %v656
  %v689 = vadd.f32 %v465, %v657
  %v690 = vadd.f32 %v466, %v658
  %v691 = vadd.f32 %v467, %v659
  %v692 = vadd.f32 %v468, %v660
  %v693 = vadd.f32 %v469, %v661
  %v694 = vld [vmem:[%s1] sm:$0xff]
  %v695 = vld [vmem:[%s1 + $0x8] sm:$0xff]
  %v696 = vld [vmem:[%s1 + $0x10] sm:$0xff]
  %v697 = vld [vmem:[%s1 + $0x18] sm:$0xff]
  %v698 = vld [vmem:[%s1 + $0x20] sm:$0xff]
  %v699 = vld [vmem:[%s1 + $0x28] sm:$0xff]
  %v700 = vld [vmem:[%s1 + $0x30] sm:$0xff]
  %v701 = vld [vmem:[%s1 + $0x38] sm:$0xff]
  %v702 = vld [vmem:[%s1 + $0x40] sm:$0xff]
  %v703 = vld [vmem:[%s1 + $0x48] sm:$0xff]
  %v704 = vld [vmem:[%s1 + $0x50] sm:$0xff]
  %v705 = vld [vmem:[%s1 + $0x58] sm:$0xff]
  %v706 = vld [vmem:[%s1 + $0x60] sm:$0xff]
  %v707 = vld [vmem:[%s1 + $0x68] sm:$0xff]
  %v708 = vld [vmem:[%s1 + $0x70] sm:$0xff]
  %v709 = vld [vmem:[%s1 + $0x78] sm:$0xff]
  %v710 = vld [vmem:[%s2] sm:$0x1]
  %v712 = vperm.slane %v710, 0
  %714 = vmatpush.msra.mxu0 %v709
  %715 = vmatpush.msra.mxu0 %v708
  %716 = vmatpush.msra.mxu0 %v707
  %717 = vmatpush.msra.mxu0 %v706
  %718 = vmatpush.msra.mxu0 %v705
  %719 = vmatpush.msra.mxu0 %v704
  %720 = vmatpush.msra.mxu0 %v703
  %721 = vmatpush.msra.mxu0 %v702
  %722 = vmatpush.msra.mxu0 %v701
  %723 = vmatpush.msra.mxu0 %v700
  %724 = vmatpush.msra.mxu0 %v699
  %725 = vmatpush.msra.mxu0 %v698
  %726 = vmatpush.msra.mxu0 %v697
  %727 = vmatpush.msra.mxu0 %v696
  %728 = vmatpush.msra.mxu0 %v695
  %729 = vmatpush.msra.mxu0 %v694
  %730 = vmatmul.f32.gmra.mxu0 %v662
  %v731 = vpop.f32.mrf.mxu0
  %v732 = vadd.f32 %v712, %v731
  %733 = vmatmul.f32.gmra.mxu0 %v663
  %v734 = vpop.f32.mrf.mxu0
  %v735 = vadd.f32 %v712, %v734
  %736 = vmatmul.f32.gmra.mxu0 %v664
  %v737 = vpop.f32.mrf.mxu0
  %v738 = vadd.f32 %v712, %v737
  %739 = vmatmul.f32.gmra.mxu0 %v665
  %v740 = vpop.f32.mrf.mxu0
  %v741 = vadd.f32 %v712, %v740
  %742 = vmatmul.f32.gmra.mxu0 %v666
  %v743 = vpop.f32.mrf.mxu0
  %v744 = vadd.f32 %v712, %v743
  %745 = vmatmul.f32.gmra.mxu0 %v667
  %v746 = vpop.f32.mrf.mxu0
  %v747 = vadd.f32 %v712, %v746
  %748 = vmatmul.f32.gmra.mxu0 %v668
  %v749 = vpop.f32.mrf.mxu0
  %v750 = vadd.f32 %v712, %v749
  %751 = vmatmul.f32.gmra.mxu0 %v669
  %v752 = vpop.f32.mrf.mxu0
  %v753 = vadd.f32 %v712, %v752
  %754 = vmatmul.f32.gmra.mxu0 %v670
  %v755 = vpop.f32.mrf.mxu0
  %v756 = vadd.f32 %v712, %v755
  %757 = vmatmul.f32.gmra.mxu0 %v671
  %v758 = vpop.f32.mrf.mxu0
  %v759 = vadd.f32 %v712, %v758
  %760 = vmatmul.f32.gmra.mxu0 %v672
  %v761 = vpop.f32.mrf.mxu0
  %v762 = vadd.f32 %v712, %v761
  %763 = vmatmul.f32.gmra.mxu0 %v673
  %v764 = vpop.f32.mrf.mxu0
  %v765 = vadd.f32 %v712, %v764
  %766 = vmatmul.f32.gmra.mxu0 %v674
  %v767 = vpop.f32.mrf.mxu0
  %v768 = vadd.f32 %v712, %v767
  %769 = vmatmul.f32.gmra.mxu0 %v675
  %v770 = vpop.f32.mrf.mxu0
  %v771 = vadd.f32 %v712, %v770
  %772 = vmatmul.f32.gmra.mxu0 %v676
  %v773 = vpop.f32.mrf.mxu0
  %v774 = vadd.f32 %v712, %v773
  %775 = vmatmul.f32.gmra.mxu0 %v677
  %v776 = vpop.f32.mrf.mxu0
  %v777 = vadd.f32 %v712, %v776
  %778 = vmatmul.f32.gmra.mxu0 %v678
  %v779 = vpop.f32.mrf.mxu0
  %v780 = vadd.f32 %v712, %v779
  %781 = vmatmul.f32.gmra.mxu0 %v679
  %v782 = vpop.f32.mrf.mxu0
  %v783 = vadd.f32 %v712, %v782
  %784 = vmatmul.f32.gmra.mxu0 %v680
  %v785 = vpop.f32.mrf.mxu0
  %v786 = vadd.f32 %v712, %v785
  %787 = vmatmul.f32.gmra.mxu0 %v681
  %v788 = vpop.f32.mrf.mxu0
  %v789 = vadd.f32 %v712, %v788
  %790 = vmatmul.f32.gmra.mxu0 %v682
  %v791 = vpop.f32.mrf.mxu0
  %v792 = vadd.f32 %v712, %v791
  %793 = vmatmul.f32.gmra.mxu0 %v683
  %v794 = vpop.f32.mrf.mxu0
  %v795 = vadd.f32 %v712, %v794
  %796 = vmatmul.f32.gmra.mxu0 %v684
  %v797 = vpop.f32.mrf.mxu0
  %v798 = vadd.f32 %v712, %v797
  %799 = vmatmul.f32.gmra.mxu0 %v685
  %v800 = vpop.f32.mrf.mxu0
  %v801 = vadd.f32 %v712, %v800
  %802 = vmatmul.f32.gmra.mxu0 %v686
  %v803 = vpop.f32.mrf.mxu0
  %v804 = vadd.f32 %v712, %v803
  %805 = vmatmul.f32.gmra.mxu0 %v687
  %v806 = vpop.f32.mrf.mxu0
  %v807 = vadd.f32 %v712, %v806
  %808 = vmatmul.f32.gmra.mxu0 %v688
  %v809 = vpop.f32.mrf.mxu0
  %v810 = vadd.f32 %v712, %v809
  %811 = vmatmul.f32.gmra.mxu0 %v689
  %v812 = vpop.f32.mrf.mxu0
  %v813 = vadd.f32 %v712, %v812
  %814 = vmatmul.f32.gmra.mxu0 %v690
  %v815 = vpop.f32.mrf.mxu0
  %v816 = vadd.f32 %v712, %v815
  %817 = vmatmul.f32.gmra.mxu0 %v691
  %v818 = vpop.f32.mrf.mxu0
  %v819 = vadd.f32 %v712, %v818
  %820 = vmatmul.f32.gmra.mxu0 %v692
  %v821 = vpop.f32.mrf.mxu0
  %v822 = vadd.f32 %v712, %v821
  %823 = vmatmul.f32.gmra.mxu0 %v693
  %v824 = vpop.f32.mrf.mxu0
  %v825 = vadd.f32 %v712, %v824
  %826 = vdwg.mxu0
  %v827 = vmax.f32 %v732, 0.0
  %v828 = vmax.f32 %v735, 0.0
  %v829 = vmax.f32 %v738, 0.0
  %v830 = vmax.f32 %v741, 0.0
  %v831 = vmax.f32 %v744, 0.0
  %v832 = vmax.f32 %v747, 0.0
  %v833 = vmax.f32 %v750, 0.0
  %v834 = vmax.f32 %v753, 0.0
  %v835 = vmax.f32 %v756, 0.0
  %v836 = vmax.f32 %v759, 0.0
  %v837 = vmax.f32 %v762, 0.0
  %v838 = vmax.f32 %v765, 0.0
  %v839 = vmax.f32 %v768, 0.0
  %v840 = vmax.f32 %v771, 0.0
  %v841 = vmax.f32 %v774, 0.0
  %v842 = vmax.f32 %v777, 0.0
  %v843 = vmax.f32 %v780, 0.0
  %v844 = vmax.f32 %v783, 0.0
  %v845 = vmax.f32 %v786, 0.0
  %v846 = vmax.f32 %v789, 0.0
  %v847 = vmax.f32 %v792, 0.0
  %v848 = vmax.f32 %v795, 0.0
  %v849 = vmax.f32 %v798, 0.0
  %v850 = vmax.f32 %v801, 0.0
  %v851 = vmax.f32 %v804, 0.0
  %v852 = vmax.f32 %v807, 0.0
  %v853 = vmax.f32 %v810, 0.0
  %v854 = vmax.f32 %v813, 0.0
  %v855 = vmax.f32 %v816, 0.0
  %v856 = vmax.f32 %v819, 0.0
  %v857 = vmax.f32 %v822, 0.0
  %v858 = vmax.f32 %v825, 0.0
  %v859 = vld [vmem:[%s3] sm:$0xff]
  %v860 = vld [vmem:[%s3 + $0x8] sm:$0xff]
  %v861 = vld [vmem:[%s3 + $0x10] sm:$0xff]
  %v862 = vld [vmem:[%s3 + $0x18] sm:$0xff]
  %v863 = vld [vmem:[%s3 + $0x20] sm:$0xff]
  %v864 = vld [vmem:[%s3 + $0x28] sm:$0xff]
  %v865 = vld [vmem:[%s3 + $0x30] sm:$0xff]
  %v866 = vld [vmem:[%s3 + $0x38] sm:$0xff]
  %v867 = vld [vmem:[%s3 + $0x40] sm:$0xff]
  %v868 = vld [vmem:[%s3 + $0x48] sm:$0xff]
  %v869 = vld [vmem:[%s3 + $0x50] sm:$0xff]
  %v870 = vld [vmem:[%s3 + $0x58] sm:$0xff]
  %v871 = vld [vmem:[%s3 + $0x60] sm:$0xff]
  %v872 = vld [vmem:[%s3 + $0x68] sm:$0xff]
  %v873 = vld [vmem:[%s3 + $0x70] sm:$0xff]
  %v874 = vld [vmem:[%s3 + $0x78] sm:$0xff]
  %v875 = vld [vmem:[%s4] sm:$0x1]
  %v877 = vperm.slane %v875, 0
  %879 = vmatpush.msra.mxu0 %v874
  %880 = vmatpush.msra.mxu0 %v873
  %881 = vmatpush.msra.mxu0 %v872
  %882 = vmatpush.msra.mxu0 %v871
  %883 = vmatpush.msra.mxu0 %v870
  %884 = vmatpush.msra.mxu0 %v869
  %885 = vmatpush.msra.mxu0 %v868
  %886 = vmatpush.msra.mxu0 %v867
  %887 = vmatpush.msra.mxu0 %v866
  %888 = vmatpush.msra.mxu0 %v865
  %889 = vmatpush.msra.mxu0 %v864
  %890 = vmatpush.msra.mxu0 %v863
  %891 = vmatpush.msra.mxu0 %v862
  %892 = vmatpush.msra.mxu0 %v861
  %893 = vmatpush.msra.mxu0 %v860
  %894 = vmatpush.msra.mxu0 %v859
  %895 = vmatmul.f32.gmra.mxu0 %v827
  %v896 = vpop.f32.mrf.mxu0
  %v897 = vadd.f32 %v877, %v896
  %898 = vmatmul.f32.gmra.mxu0 %v828
  %v899 = vpop.f32.mrf.mxu0
  %v900 = vadd.f32 %v877, %v899
  %901 = vmatmul.f32.gmra.mxu0 %v829
  %v902 = vpop.f32.mrf.mxu0
  %v903 = vadd.f32 %v877, %v902
  %904 = vmatmul.f32.gmra.mxu0 %v830
  %v905 = vpop.f32.mrf.mxu0
  %v906 = vadd.f32 %v877, %v905
  %907 = vmatmul.f32.gmra.mxu0 %v831
  %v908 = vpop.f32.mrf.mxu0
  %v909 = vadd.f32 %v877, %v908
  %910 = vmatmul.f32.gmra.mxu0 %v832
  %v911 = vpop.f32.mrf.mxu0
  %v912 = vadd.f32 %v877, %v911
  %913 = vmatmul.f32.gmra.mxu0 %v833
  %v914 = vpop.f32.mrf.mxu0
  %v915 = vadd.f32 %v877, %v914
  %916 = vmatmul.f32.gmra.mxu0 %v834
  %v917 = vpop.f32.mrf.mxu0
  %v918 = vadd.f32 %v877, %v917
  %919 = vmatmul.f32.gmra.mxu0 %v835
  %v920 = vpop.f32.mrf.mxu0
  %v921 = vadd.f32 %v877, %v920
  %922 = vmatmul.f32.gmra.mxu0 %v836
  %v923 = vpop.f32.mrf.mxu0
  %v924 = vadd.f32 %v877, %v923
  %925 = vmatmul.f32.gmra.mxu0 %v837
  %v926 = vpop.f32.mrf.mxu0
  %v927 = vadd.f32 %v877, %v926
  %928 = vmatmul.f32.gmra.mxu0 %v838
  %v929 = vpop.f32.mrf.mxu0
  %v930 = vadd.f32 %v877, %v929
  %931 = vmatmul.f32.gmra.mxu0 %v839
  %v932 = vpop.f32.mrf.mxu0
  %v933 = vadd.f32 %v877, %v932
  %934 = vmatmul.f32.gmra.mxu0 %v840
  %v935 = vpop.f32.mrf.mxu0
  %v936 = vadd.f32 %v877, %v935
  %937 = vmatmul.f32.gmra.mxu0 %v841
  %v938 = vpop.f32.mrf.mxu0
  %v939 = vadd.f32 %v877, %v938
  %940 = vmatmul.f32.gmra.mxu0 %v842
  %v941 = vpop.f32.mrf.mxu0
  %v942 = vadd.f32 %v877, %v941
  %943 = vmatmul.f32.gmra.mxu0 %v843
  %v944 = vpop.f32.mrf.mxu0
  %v945 = vadd.f32 %v877, %v944
  %946 = vmatmul.f32.gmra.mxu0 %v844
  %v947 = vpop.f32.mrf.mxu0
  %v948 = vadd.f32 %v877, %v947
  %949 = vmatmul.f32.gmra.mxu0 %v845
  %v950 = vpop.f32.mrf.mxu0
  %v951 = vadd.f32 %v877, %v950
  %952 = vmatmul.f32.gmra.mxu0 %v846
  %v953 = vpop.f32.mrf.mxu0
  %v954 = vadd.f32 %v877, %v953
  %955 = vmatmul.f32.gmra.mxu0 %v847
  %v956 = vpop.f32.mrf.mxu0
  %v957 = vadd.f32 %v877, %v956
  %958 = vmatmul.f32.gmra.mxu0 %v848
  %v959 = vpop.f32.mrf.mxu0
  %v960 = vadd.f32 %v877, %v959
  %961 = vmatmul.f32.gmra.mxu0 %v849
  %v962 = vpop.f32.mrf.mxu0
  %v963 = vadd.f32 %v877, %v962
  %964 = vmatmul.f32.gmra.mxu0 %v850
  %v965 = vpop.f32.mrf.mxu0
  %v966 = vadd.f32 %v877, %v965
  %967 = vmatmul.f32.gmra.mxu0 %v851
  %v968 = vpop.f32.mrf.mxu0
  %v969 = vadd.f32 %v877, %v968
  %970 = vmatmul.f32.gmra.mxu0 %v852
  %v971 = vpop.f32.mrf.mxu0
  %v972 = vadd.f32 %v877, %v971
  %973 = vmatmul.f32.gmra.mxu0 %v853
  %v974 = vpop.f32.mrf.mxu0
  %v975 = vadd.f32 %v877, %v974
  %976 = vmatmul.f32.gmra.mxu0 %v854
  %v977 = vpop.f32.mrf.mxu0
  %v978 = vadd.f32 %v877, %v977
  %979 = vmatmul.f32.gmra.mxu0 %v855
  %v980 = vpop.f32.mrf.mxu0
  %v981 = vadd.f32 %v877, %v980
  %982 = vmatmul.f32.gmra.mxu0 %v856
  %v983 = vpop.f32.mrf.mxu0
  %v984 = vadd.f32 %v877, %v983
  %985 = vmatmul.f32.gmra.mxu0 %v857
  %v986 = vpop.f32.mrf.mxu0
  %v987 = vadd.f32 %v877, %v986
  %988 = vmatmul.f32.gmra.mxu0 %v858
  %v989 = vpop.f32.mrf.mxu0
  %v990 = vadd.f32 %v877, %v989
  %991 = vdwg.mxu0
  %vm992 = vcmask 261120
  %993 = vst.msk [vmem:[%s5] sm:$0xff] %vm992, %v897
  %994 = vst.msk [vmem:[%s5 + $0x8] sm:$0xff] %vm992, %v900
  %995 = vst.msk [vmem:[%s5 + $0x10] sm:$0xff] %vm992, %v903
  %996 = vst.msk [vmem:[%s5 + $0x18] sm:$0xff] %vm992, %v906
  %997 = vst.msk [vmem:[%s5 + $0x20] sm:$0xff] %vm992, %v909
  %998 = vst.msk [vmem:[%s5 + $0x28] sm:$0xff] %vm992, %v912
  %999 = vst.msk [vmem:[%s5 + $0x30] sm:$0xff] %vm992, %v915
  %1000 = vst.msk [vmem:[%s5 + $0x38] sm:$0xff] %vm992, %v918
  %1001 = vst.msk [vmem:[%s5 + $0x40] sm:$0xff] %vm992, %v921
  %1002 = vst.msk [vmem:[%s5 + $0x48] sm:$0xff] %vm992, %v924
  %1003 = vst.msk [vmem:[%s5 + $0x50] sm:$0xff] %vm992, %v927
  %1004 = vst.msk [vmem:[%s5 + $0x58] sm:$0xff] %vm992, %v930
  %1005 = vst.msk [vmem:[%s5 + $0x60] sm:$0xff] %vm992, %v933
  %1006 = vst.msk [vmem:[%s5 + $0x68] sm:$0xff] %vm992, %v936
  %1007 = vst.msk [vmem:[%s5 + $0x70] sm:$0xff] %vm992, %v939
  %1008 = vst.msk [vmem:[%s5 + $0x78] sm:$0xff] %vm992, %v942
  %1009 = vst.msk [vmem:[%s5 + $0x80] sm:$0xff] %vm992, %v945
  %1010 = vst.msk [vmem:[%s5 + $0x88] sm:$0xff] %vm992, %v948
  %1011 = vst.msk [vmem:[%s5 + $0x90] sm:$0xff] %vm992, %v951
  %1012 = vst.msk [vmem:[%s5 + $0x98] sm:$0xff] %vm992, %v954
  %1013 = vst.msk [vmem:[%s5 + $0xa0] sm:$0xff] %vm992, %v957
  %1014 = vst.msk [vmem:[%s5 + $0xa8] sm:$0xff] %vm992, %v960
  %1015 = vst.msk [vmem:[%s5 + $0xb0] sm:$0xff] %vm992, %v963
  %1016 = vst.msk [vmem:[%s5 + $0xb8] sm:$0xff] %vm992, %v966
  %1017 = vst.msk [vmem:[%s5 + $0xc0] sm:$0xff] %vm992, %v969
  %1018 = vst.msk [vmem:[%s5 + $0xc8] sm:$0xff] %vm992, %v972
  %1019 = vst.msk [vmem:[%s5 + $0xd0] sm:$0xff] %vm992, %v975
  %1020 = vst.msk [vmem:[%s5 + $0xd8] sm:$0xff] %vm992, %v978
  %1021 = vst.msk [vmem:[%s5 + $0xe0] sm:$0xff] %vm992, %v981
  %1022 = vst.msk [vmem:[%s5 + $0xe8] sm:$0xff] %vm992, %v984
  %1023 = vst.msk [vmem:[%s5 + $0xf0] sm:$0xff] %vm992, %v987
  %1024 = vst.msk [vmem:[%s5 + $0xf8] sm:$0xff] %vm992, %v990
  // Predicated region
  $region22: #{tpu_custom_call.1} parent=0 // pred_check
    _
  $region23: #{tpu_custom_call.1} parent=0 // pred_check_branch
    %1026 = sbr.rel (0) target = $region25
  $region24: #{tpu_custom_call.1} parent=0 // pred_region
    _
  $region25: #{tpu_custom_call.1} parent=0 // pred_fallthru
    _
  // Predicated region
  $region26: #{tpu_custom_call.1} parent=0 // pred_check
    _
  $region27: #{tpu_custom_call.1} parent=0 // pred_check_branch
    %1028 = sbr.rel (0) target = $region29
  $region28: #{tpu_custom_call.1} parent=0 // pred_region
    _
  $region29: #{tpu_custom_call.1} parent=0 // pred_fallthru
    _

</llo_original>
